<compile_context>
chip_gen: v6e
topology: v6e:2x2x1
jax: 0.10.0
libtpu: 0.0.40
codegen_flags: <defaults>
</compile_context>

<pallas_src>
import jax
import jax.numpy as jnp
from jax.experimental import pallas as pl
from jax.experimental.pallas import tpu as pltpu

_LANES = 128


def _sublane_multiple(dtype) -> int:
    # f32 -> 8 rows, bf16/f16 -> 16, int8/fp8 -> 32 (keeps vregs fully packed).
    itemsize = jnp.dtype(dtype).itemsize
    return max(8, 32 // max(1, itemsize))


def _copy_kernel(x_ref, o_ref):
    # TODO(synk): Encoder.forward raises NotImplementedError in the reference
    # module (abstract base class) — no computation exists to reproduce, so
    # this kernel is a tiled identity pass-through placeholder.  When a real
    # encoder (attention/FFN) is implemented, replace this with an MXU-tiled
    # (M//tm, N//tn, K//tk) pipeline with an f32 VMEM accumulator.
    o_ref[...] = x_ref[...]


def encoder_forward(x, *, target_tile_rows: int = 1024):
    """Pallas stand-in for Encoder.forward (abstract in the reference).

    Identity semantics, executed through a tiled, pipelined Pallas copy so the
    TPU kernel path is exercised end-to-end with lane-dense stores.
    """
    orig_shape = x.shape
    orig_dtype = x.dtype
    n = x.size

    sub = _sublane_multiple(orig_dtype)

    # --- Build a lane-dense (rows, 128) slab; pad so every block is full. ---
    row_unit = sub * _LANES
    padded_n = ((n + row_unit - 1) // row_unit) * row_unit
    flat = jnp.ravel(x)
    if padded_n != n:
        flat = jnp.pad(flat, (0, padded_n - n))
    rows = padded_n // _LANES

    # Tile rows: large enough to amortize the ~0.35us/grid-step overhead,
    # small enough that (in + out) x double-buffering stays well under the
    # v7x 64 MiB / 32 MiB-scoped VMEM budget.
    tile_rows = min(rows, max(sub, (target_tile_rows // sub) * sub))
    padded_rows = ((rows + tile_rows - 1) // tile_rows) * tile_rows
    if padded_rows != rows:
        flat = jnp.pad(flat, (0, (padded_rows - rows) * _LANES))
        rows = padded_rows
    slab = flat.reshape(rows, _LANES)

    grid = (rows // tile_rows,)

    out = pl.pallas_call(
        _copy_kernel,
        out_shape=jax.ShapeDtypeStruct((rows, _LANES), orig_dtype),
        grid=grid,
        in_specs=[pl.BlockSpec((tile_rows, _LANES), lambda i: (i, 0))],
        out_specs=pl.BlockSpec((tile_rows, _LANES), lambda i: (i, 0)),
        # Identity path: let the output alias the (reshaped) input buffer so
        # no separate HBM output allocation is emitted.
        input_output_aliases={0: 0},
        compiler_params=pltpu.CompilerParams(
            # "parallel": shards the copy across v7x's 2 TensorCores;
            # harmless on single-TC v5e/v6e.
            dimension_semantics=("parallel",),
        ),
    )(slab)

    return out.reshape(-1)[:n].reshape(orig_shape)


if __name__ == "__main__":
    # No parameters to initialize: Encoder.__init__ defines none.
    key = jax.random.PRNGKey(0)
    seq, hidden = 8, 32
    x = jax.random.normal(key, (seq, hidden), dtype=jnp.float32)

    # jit so the input->slab reshape is an intermediate and the
    # input_output_aliases donation is clean.
    y = jax.jit(encoder_forward)(x)
    jax.block_until_ready(y)

    # Sanity check: identity semantics (the only well-defined behavior here).
    assert y.shape == x.shape and y.dtype == x.dtype
    assert bool(jnp.allclose(y, x))

    print("KERNEL_OK")
</pallas_src>

<mosaic_0001>
module attributes {stable_mosaic.version = 11 : i64} {
  func.func @_copy_kernel(%arg0: i32, %arg1: memref<8x128xf32, #tpu.memory_space<vmem>>, %arg2: memref<8x128xf32, #tpu.memory_space<vmem>>) attributes {dimension_semantics = [#tpu.dimension_semantics<parallel>], iteration_bounds = array<i64: 1>, scalar_prefetch = 0 : i64, scratch_operands = 0 : i64, tpu.core_type = #tpu.core_type<tc>, window_params = [{transform_indices = @transform_0, window_bounds = array<i64: 8, 128>}, {transform_indices = @transform_1, window_bounds = array<i64: 8, 128>}]} {
    %c0 = arith.constant 0 : index
    %c0_0 = arith.constant 0 : index
    %0 = vector.load %arg1[%c0, %c0_0] : memref<8x128xf32, #tpu.memory_space<vmem>>, vector<8x128xf32>
    %c0_1 = arith.constant 0 : index
    %c0_2 = arith.constant 0 : index
    %1 = vector.load %arg2[%c0_1, %c0_2] : memref<8x128xf32, #tpu.memory_space<vmem>>, vector<8x128xf32>
    tpu.vector_store %arg2[%c0_1, %c0_2], %0 {strides = array<i32>} : memref<8x128xf32, #tpu.memory_space<vmem>>, vector<8x128xf32>,
    return
  }
  func.func @transform_0(%arg0: i32) -> (i32, i32) {
    %c0_i32 = arith.constant 0 : i32
    %c0_i32_0 = arith.constant 0 : i32
    return %arg0, %c0_i32 : i32, i32
  }
  func.func @transform_1(%arg0: i32) -> (i32, i32) {
    %c0_i32 = arith.constant 0 : i32
    %c0_i32_0 = arith.constant 0 : i32
    return %arg0, %c0_i32 : i32, i32
  }
}

</mosaic_0001>

<llo_original>
// kernel: encoder_forward.1
$region0: #{encoder_forward.1}
  #allocation0 [shape = 'u32[]', space=smem, size = 0x4, offset = 0x4, fixed_abs, tag = 'smem constant byte address 0x4 - core index']
  #allocation1 [shape = 'u32[144,128]{1,0:T(1,128)}', space=vmem, size = 0x12000, scoped, tag = 'internal scratch']
  %s0 = inlined_call_operand.vmem [shape: f32[8,128], index: 0, kind: input, shape index: {}, may-alias: {0,1}]
  %s1 = inlined_call_operand.vmem [shape: f32[8,128], index: 1, kind: output, shape index: {}, may-alias: {0,1}]
  %s2 = sld [smem:[#allocation0]]
  $region14: #{encoder_forward.1} parent=0
    _
  %s4 = ssub.s32 1, %s2
  %s5 = scalar_select 0, %s4, %s2
  // Predicated region
  $region2: #{encoder_forward.1} parent=0 // pred_check
    _
  $region3: #{encoder_forward.1} parent=0 // pred_check_branch
    %7 = sbr.rel (0) target = $region5
  $region4: #{encoder_forward.1} parent=0 // pred_region
    _
  $region5: #{encoder_forward.1} parent=0 // pred_fallthru
    _
  %v8 = vld [vmem:[%s0] sm:$0xff]
  %9 = vst [vmem:[%s1] sm:$0xff] %v8
  // Predicated region
  $region6: #{encoder_forward.1} parent=0 // pred_check
    _
  $region7: #{encoder_forward.1} parent=0 // pred_check_branch
    %11 = sbr.rel (0) target = $region9
  $region8: #{encoder_forward.1} parent=0 // pred_region
    _
  $region9: #{encoder_forward.1} parent=0 // pred_fallthru
    _
  // Predicated region
  $region10: #{encoder_forward.1} parent=0 // pred_check
    _
  $region11: #{encoder_forward.1} parent=0 // pred_check_branch
    %13 = sbr.rel (0) target = $region13
  $region12: #{encoder_forward.1} parent=0 // pred_region
    _
  $region13: #{encoder_forward.1} parent=0 // pred_fallthru
    _

</llo_original>
